<compile_context>
chip_gen: v6e
topology: v6e:2x2x1
jax: 0.10.0
libtpu: 0.0.40
codegen_flags: <defaults>
</compile_context>

<pallas_src>
import jax
import jax.numpy as jnp
from jax.experimental import pallas as pl
from jax.experimental.pallas import tpu as pltpu

NUM_PROBLEMS = 24
IN_DIM = NUM_PROBLEMS * 7                                    # 168
LAYER_DIMS = [IN_DIM, 50, 50, 50, 50, 50, 50, 25, 1]          # 8 linear layers
NUM_LAYERS = len(LAYER_DIMS) - 1

LANE = 128
BF16_SUB = 16            # bf16 sublane tile (second-minor granularity)
MAX_BLOCK_B = 1024       # cap on the per-grid-step batch tile


def _round_up(n, m):
    return (n + m - 1) // m * m


def _cdiv(a, b):
    return (a + b - 1) // b


# Padded geometry: every layer's fan_out is padded to 128 lanes.  The first
# layer's fan_in (168) pads to 176 only (keeps bf16 slab slices tile-aligned
# while minimising input bytes); the remaining fan_ins pad to 128.
K_PAD = _round_up(IN_DIM, BF16_SUB)                          # 176
PAD_IN = [K_PAD] + [LANE] * (NUM_LAYERS - 1)                 # rows per weight block
W_SLAB_ROWS = sum(PAD_IN)                                    # 176 + 7*128 = 1072


def _mlp_kernel(x_ref, w_ref, b_ref, out_ref):
    """Whole 8-layer sigmoid MLP fused into one kernel invocation.

    x_ref  : (Bt, K_PAD)          bf16  zero-padded input features
    w_ref  : (W_SLAB_ROWS, 128)   bf16  all 8 weight matrices stacked row-wise
    b_ref  : (NUM_LAYERS, 128)    f32   one zero-padded bias row per layer
    out_ref: (Bt, 128)            bf16  column 0 holds the real scalar output
    """
    h = x_ref[...]                      # bf16 activation (MXU operand)
    b_all = b_ref[...]                  # (8, 128) f32

    off = 0
    for i in range(NUM_LAYERS):
        rows = PAD_IN[i]
        w = w_ref[off:off + rows, :]    # static, tile-aligned bf16 slice
        off += rows
        # bf16 x bf16 -> f32 accumulation on the MXU.
        z = jnp.dot(h, w, preferred_element_type=jnp.float32)
        z = z + b_all[i:i + 1, :]
        # Exact sigmoid with one EUP transcendental per element.
        s = 0.5 * jnp.tanh(0.5 * z) + 0.5
        # dropout(training=False) == identity; nothing to do.
        # Padded lanes carry sigmoid(0)=0.5 but hit all-zero weight rows in the
        # next layer, so they contribute nothing to the real outputs.
        h = s.astype(jnp.bfloat16)

    out_ref[...] = h                    # lane-dense bf16 store (unmasked vst)


def pack_params(weights, biases):
    """Pad each layer to (PAD_IN[i], 128): weights -> one bf16 row-stacked slab,
    biases -> one f32 (NUM_LAYERS, 128) slab.  Padding MUST stay exactly zero."""
    w_blocks, b_rows = [], []
    for i, (w, b) in enumerate(zip(weights, biases)):
        fi, fo = w.shape
        wp = jnp.zeros((PAD_IN[i], LANE), jnp.bfloat16)
        wp = wp.at[:fi, :fo].set(w.astype(jnp.bfloat16))
        bp = jnp.zeros((1, LANE), jnp.float32)
        bp = bp.at[:, :fo].set(b.reshape(1, -1).astype(jnp.float32))
        w_blocks.append(wp)
        b_rows.append(bp)
    w_slab = jnp.concatenate(w_blocks, axis=0)        # (1072, 128) bf16
    b_slab = jnp.concatenate(b_rows, axis=0)          # (8, 128)    f32
    return w_slab, b_slab


def _choose_tiling(batch):
    """Pick (block_b, pad_b).  Big tiles amortize the ~0.35us per-step overhead;
    batches >= 256 are split into >=2 grid steps so the 'parallel' axis can
    shard across both v7x TensorCores (v5e/v6e just see a short serial loop)."""
    if batch < 256:
        block_b = _round_up(max(batch, 1), BF16_SUB)
        return block_b, block_b
    n_tiles = max(2, _cdiv(batch, MAX_BLOCK_B))
    block_b = _round_up(_cdiv(batch, n_tiles), BF16_SUB)
    return block_b, n_tiles * block_b


@jax.jit
def neural_net_forward(x, w_slab, b_slab):
    """x: (B, 168) f32; returns (B, 1) f32."""
    batch = x.shape[0]
    block_b, pad_b = _choose_tiling(batch)

    # bf16 input padded to 176 lanes: ~352 B/row of HBM traffic (was 1024 B/row).
    xp = jnp.zeros((pad_b, K_PAD), jnp.bfloat16)
    xp = xp.at[:batch, :IN_DIM].set(x.astype(jnp.bfloat16))

    out = pl.pallas_call(
        _mlp_kernel,
        out_shape=jax.ShapeDtypeStruct((pad_b, LANE), jnp.bfloat16),
        grid=(pad_b // block_b,),
        in_specs=[
            pl.BlockSpec((block_b, K_PAD), lambda i: (i, 0)),
            pl.BlockSpec((W_SLAB_ROWS, LANE), lambda i: (0, 0)),  # VMEM-resident
            pl.BlockSpec((NUM_LAYERS, LANE), lambda i: (0, 0)),   # VMEM-resident
        ],
        out_specs=pl.BlockSpec((block_b, LANE), lambda i: (i, 0)),
        compiler_params=pltpu.CompilerParams(
            dimension_semantics=("parallel",),     # batch tiles -> both v7x TCs
            vmem_limit_bytes=32 * 1024 * 1024),
    )(xp, w_slab, b_slab)

    return out[:batch, :1].astype(jnp.float32)


def init_params(key):
    """Deterministic PyTorch-style Linear init: U(-1/sqrt(fan_in), 1/sqrt(fan_in))."""
    weights, biases = [], []
    for i in range(NUM_LAYERS):
        fan_in, fan_out = LAYER_DIMS[i], LAYER_DIMS[i + 1]
        key, kw, kb = jax.random.split(key, 3)
        bound = 1.0 / (fan_in ** 0.5)
        # stored as (in, out) == transpose of PyTorch's (out, in)
        w = jax.random.uniform(kw, (fan_in, fan_out), jnp.float32, -bound, bound)
        b = jax.random.uniform(kb, (1, fan_out), jnp.float32, -bound, bound)
        weights.append(w)
        biases.append(b)
    return weights, biases


def _reference_forward(x, weights, biases):
    """Pure-JAX reference mirroring the kernel's numerics: bf16-rounded matmul
    operands (weights and activations), f32 accumulation, exact sigmoid, bf16
    final output."""
    h = x
    for w, b in zip(weights, biases):
        wq = w.astype(jnp.bfloat16).astype(jnp.float32)
        hq = h.astype(jnp.bfloat16).astype(jnp.float32)
        h = jax.nn.sigmoid(hq @ wq + b)
    return h.astype(jnp.bfloat16).astype(jnp.float32)


if __name__ == "__main__":
    key = jax.random.PRNGKey(0)
    key, kx = jax.random.split(key)

    batch = 8
    x = jax.random.normal(kx, (batch, IN_DIM), jnp.float32)
    weights, biases = init_params(key)
    w_slab, b_slab = pack_params(weights, biases)

    out = neural_net_forward(x, w_slab, b_slab)
    out = jax.block_until_ready(out)

    ref = _reference_forward(x, weights, biases)
    assert out.shape == (batch, 1), out.shape
    # Tolerance covers bf16 matmul operands / bf16 output rounding (sigmoid
    # outputs live in (0, 1)); no approx-reciprocal error anymore.
    assert jnp.allclose(out, ref, atol=1e-2, rtol=0.0), (
        "mismatch vs reference: max abs diff = %e"
        % float(jnp.max(jnp.abs(out - ref))))

    print("KERNEL_OK")
</pallas_src>

<mosaic_0001>
module attributes {stable_mosaic.version = 11 : i64} {
  func.func @_mlp_kernel(%arg0: i32, %arg1: memref<16x176xbf16, #tpu.memory_space<vmem>>, %arg2: memref<1072x128xbf16, #tpu.memory_space<vmem>>, %arg3: memref<8x128xf32, #tpu.memory_space<vmem>>, %arg4: memref<16x128xbf16, #tpu.memory_space<vmem>>) attributes {dimension_semantics = [#tpu.dimension_semantics<parallel>], iteration_bounds = array<i64: 1>, scalar_prefetch = 0 : i64, scratch_operands = 0 : i64, tpu.core_type = #tpu.core_type<tc>, window_params = [{transform_indices = @transform_0, window_bounds = array<i64: 16, 176>}, {pipeline_mode = #tpu.pipeline_mode<synchronous>, transform_indices = @transform_1, window_bounds = array<i64: 1072, 128>}, {pipeline_mode = #tpu.pipeline_mode<synchronous>, transform_indices = @transform_2, window_bounds = array<i64: 8, 128>}, {transform_indices = @transform_3, window_bounds = array<i64: 16, 128>}]} {
    %c0 = arith.constant 0 : index
    %c0_0 = arith.constant 0 : index
    %0 = vector.load %arg1[%c0, %c0_0] : memref<16x176xbf16, #tpu.memory_space<vmem>>, vector<16x176xbf16>
    %c0_1 = arith.constant 0 : index
    %c0_2 = arith.constant 0 : index
    %1 = vector.load %arg3[%c0_1, %c0_2] : memref<8x128xf32, #tpu.memory_space<vmem>>, vector<8x128xf32>
    %c0_3 = arith.constant 0 : index
    %c0_4 = arith.constant 0 : index
    %2 = vector.load %arg2[%c0_3, %c0_4] : memref<1072x128xbf16, #tpu.memory_space<vmem>>, vector<176x128xbf16>
    %cst = arith.constant dense<0.000000e+00> : vector<16x128xf32>
    %3 = tpu.matmul %0, %2, %cst {dimension_numbers = #tpu.dot_dimension_numbers<[1], [0], [0], [1], [0, 0, 1, 1], [], []>} : vector<16x176xbf16>, vector<176x128xbf16>, vector<16x128xf32> -> vector<16x128xf32>
    %4 = vector.extract_strided_slice %1 {offsets = [0, 0], sizes = [1, 128], strides = [1, 1]} : vector<8x128xf32> to vector<1x128xf32>
    %5 = vector.broadcast %4 : vector<1x128xf32> to vector<16x128xf32>
    %6 = arith.addf %3, %5 : vector<16x128xf32>
    %cst_5 = arith.constant 5.000000e-01 : f32
    %7 = vector.broadcast %cst_5 : f32 to vector<16x128xf32>
    %8 = arith.mulf %7, %6 : vector<16x128xf32>
    %9 = math.tanh %8 : vector<16x128xf32>
    %cst_6 = arith.constant 5.000000e-01 : f32
    %10 = vector.broadcast %cst_6 : f32 to vector<16x128xf32>
    %11 = arith.mulf %10, %9 : vector<16x128xf32>
    %cst_7 = arith.constant 5.000000e-01 : f32
    %12 = vector.broadcast %cst_7 : f32 to vector<16x128xf32>
    %13 = arith.addf %11, %12 : vector<16x128xf32>
    %14 = arith.truncf %13 : vector<16x128xf32> to vector<16x128xbf16>
    %c176 = arith.constant 176 : index
    %c0_8 = arith.constant 0 : index
    %15 = vector.load %arg2[%c176, %c0_8] : memref<1072x128xbf16, #tpu.memory_space<vmem>>, vector<128x128xbf16>
    %cst_9 = arith.constant dense<0.000000e+00> : vector<16x128xf32>
    %16 = tpu.matmul %14, %15, %cst_9 {dimension_numbers = #tpu.dot_dimension_numbers<[1], [0], [0], [1], [0, 0, 1, 1], [], []>} : vector<16x128xbf16>, vector<128x128xbf16>, vector<16x128xf32> -> vector<16x128xf32>
    %17 = vector.extract_strided_slice %1 {offsets = [1, 0], sizes = [1, 128], strides = [1, 1]} : vector<8x128xf32> to vector<1x128xf32>
    %18 = vector.broadcast %17 : vector<1x128xf32> to vector<16x128xf32>
    %19 = arith.addf %16, %18 : vector<16x128xf32>
    %cst_10 = arith.constant 5.000000e-01 : f32
    %20 = vector.broadcast %cst_10 : f32 to vector<16x128xf32>
    %21 = arith.mulf %20, %19 : vector<16x128xf32>
    %22 = math.tanh %21 : vector<16x128xf32>
    %cst_11 = arith.constant 5.000000e-01 : f32
    %23 = vector.broadcast %cst_11 : f32 to vector<16x128xf32>
    %24 = arith.mulf %23, %22 : vector<16x128xf32>
    %cst_12 = arith.constant 5.000000e-01 : f32
    %25 = vector.broadcast %cst_12 : f32 to vector<16x128xf32>
    %26 = arith.addf %24, %25 : vector<16x128xf32>
    %27 = arith.truncf %26 : vector<16x128xf32> to vector<16x128xbf16>
    %c304 = arith.constant 304 : index
    %c0_13 = arith.constant 0 : index
    %28 = vector.load %arg2[%c304, %c0_13] : memref<1072x128xbf16, #tpu.memory_space<vmem>>, vector<128x128xbf16>
    %cst_14 = arith.constant dense<0.000000e+00> : vector<16x128xf32>
    %29 = tpu.matmul %27, %28, %cst_14 {dimension_numbers = #tpu.dot_dimension_numbers<[1], [0], [0], [1], [0, 0, 1, 1], [], []>} : vector<16x128xbf16>, vector<128x128xbf16>, vector<16x128xf32> -> vector<16x128xf32>
    %30 = vector.extract_strided_slice %1 {offsets = [2, 0], sizes = [1, 128], strides = [1, 1]} : vector<8x128xf32> to vector<1x128xf32>
    %31 = vector.broadcast %30 : vector<1x128xf32> to vector<16x128xf32>
    %32 = arith.addf %29, %31 : vector<16x128xf32>
    %cst_15 = arith.constant 5.000000e-01 : f32
    %33 = vector.broadcast %cst_15 : f32 to vector<16x128xf32>
    %34 = arith.mulf %33, %32 : vector<16x128xf32>
    %35 = math.tanh %34 : vector<16x128xf32>
    %cst_16 = arith.constant 5.000000e-01 : f32
    %36 = vector.broadcast %cst_16 : f32 to vector<16x128xf32>
    %37 = arith.mulf %36, %35 : vector<16x128xf32>
    %cst_17 = arith.constant 5.000000e-01 : f32
    %38 = vector.broadcast %cst_17 : f32 to vector<16x128xf32>
    %39 = arith.addf %37, %38 : vector<16x128xf32>
    %40 = arith.truncf %39 : vector<16x128xf32> to vector<16x128xbf16>
    %c432 = arith.constant 432 : index
    %c0_18 = arith.constant 0 : index
    %41 = vector.load %arg2[%c432, %c0_18] : memref<1072x128xbf16, #tpu.memory_space<vmem>>, vector<128x128xbf16>
    %cst_19 = arith.constant dense<0.000000e+00> : vector<16x128xf32>
    %42 = tpu.matmul %40, %41, %cst_19 {dimension_numbers = #tpu.dot_dimension_numbers<[1], [0], [0], [1], [0, 0, 1, 1], [], []>} : vector<16x128xbf16>, vector<128x128xbf16>, vector<16x128xf32> -> vector<16x128xf32>
    %43 = vector.extract_strided_slice %1 {offsets = [3, 0], sizes = [1, 128], strides = [1, 1]} : vector<8x128xf32> to vector<1x128xf32>
    %44 = vector.broadcast %43 : vector<1x128xf32> to vector<16x128xf32>
    %45 = arith.addf %42, %44 : vector<16x128xf32>
    %cst_20 = arith.constant 5.000000e-01 : f32
    %46 = vector.broadcast %cst_20 : f32 to vector<16x128xf32>
    %47 = arith.mulf %46, %45 : vector<16x128xf32>
    %48 = math.tanh %47 : vector<16x128xf32>
    %cst_21 = arith.constant 5.000000e-01 : f32
    %49 = vector.broadcast %cst_21 : f32 to vector<16x128xf32>
    %50 = arith.mulf %49, %48 : vector<16x128xf32>
    %cst_22 = arith.constant 5.000000e-01 : f32
    %51 = vector.broadcast %cst_22 : f32 to vector<16x128xf32>
    %52 = arith.addf %50, %51 : vector<16x128xf32>
    %53 = arith.truncf %52 : vector<16x128xf32> to vector<16x128xbf16>
    %c560 = arith.constant 560 : index
    %c0_23 = arith.constant 0 : index
    %54 = vector.load %arg2[%c560, %c0_23] : memref<1072x128xbf16, #tpu.memory_space<vmem>>, vector<128x128xbf16>
    %cst_24 = arith.constant dense<0.000000e+00> : vector<16x128xf32>
    %55 = tpu.matmul %53, %54, %cst_24 {dimension_numbers = #tpu.dot_dimension_numbers<[1], [0], [0], [1], [0, 0, 1, 1], [], []>} : vector<16x128xbf16>, vector<128x128xbf16>, vector<16x128xf32> -> vector<16x128xf32>
    %56 = vector.extract_strided_slice %1 {offsets = [4, 0], sizes = [1, 128], strides = [1, 1]} : vector<8x128xf32> to vector<1x128xf32>
    %57 = vector.broadcast %56 : vector<1x128xf32> to vector<16x128xf32>
    %58 = arith.addf %55, %57 : vector<16x128xf32>
    %cst_25 = arith.constant 5.000000e-01 : f32
    %59 = vector.broadcast %cst_25 : f32 to vector<16x128xf32>
    %60 = arith.mulf %59, %58 : vector<16x128xf32>
    %61 = math.tanh %60 : vector<16x128xf32>
    %cst_26 = arith.constant 5.000000e-01 : f32
    %62 = vector.broadcast %cst_26 : f32 to vector<16x128xf32>
    %63 = arith.mulf %62, %61 : vector<16x128xf32>
    %cst_27 = arith.constant 5.000000e-01 : f32
    %64 = vector.broadcast %cst_27 : f32 to vector<16x128xf32>
    %65 = arith.addf %63, %64 : vector<16x128xf32>
    %66 = arith.truncf %65 : vector<16x128xf32> to vector<16x128xbf16>
    %c688 = arith.constant 688 : index
    %c0_28 = arith.constant 0 : index
    %67 = vector.load %arg2[%c688, %c0_28] : memref<1072x128xbf16, #tpu.memory_space<vmem>>, vector<128x128xbf16>
    %cst_29 = arith.constant dense<0.000000e+00> : vector<16x128xf32>
    %68 = tpu.matmul %66, %67, %cst_29 {dimension_numbers = #tpu.dot_dimension_numbers<[1], [0], [0], [1], [0, 0, 1, 1], [], []>} : vector<16x128xbf16>, vector<128x128xbf16>, vector<16x128xf32> -> vector<16x128xf32>
    %69 = vector.extract_strided_slice %1 {offsets = [5, 0], sizes = [1, 128], strides = [1, 1]} : vector<8x128xf32> to vector<1x128xf32>
    %70 = vector.broadcast %69 : vector<1x128xf32> to vector<16x128xf32>
    %71 = arith.addf %68, %70 : vector<16x128xf32>
    %cst_30 = arith.constant 5.000000e-01 : f32
    %72 = vector.broadcast %cst_30 : f32 to vector<16x128xf32>
    %73 = arith.mulf %72, %71 : vector<16x128xf32>
    %74 = math.tanh %73 : vector<16x128xf32>
    %cst_31 = arith.constant 5.000000e-01 : f32
    %75 = vector.broadcast %cst_31 : f32 to vector<16x128xf32>
    %76 = arith.mulf %75, %74 : vector<16x128xf32>
    %cst_32 = arith.constant 5.000000e-01 : f32
    %77 = vector.broadcast %cst_32 : f32 to vector<16x128xf32>
    %78 = arith.addf %76, %77 : vector<16x128xf32>
    %79 = arith.truncf %78 : vector<16x128xf32> to vector<16x128xbf16>
    %c816 = arith.constant 816 : index
    %c0_33 = arith.constant 0 : index
    %80 = vector.load %arg2[%c816, %c0_33] : memref<1072x128xbf16, #tpu.memory_space<vmem>>, vector<128x128xbf16>
    %cst_34 = arith.constant dense<0.000000e+00> : vector<16x128xf32>
    %81 = tpu.matmul %79, %80, %cst_34 {dimension_numbers = #tpu.dot_dimension_numbers<[1], [0], [0], [1], [0, 0, 1, 1], [], []>} : vector<16x128xbf16>, vector<128x128xbf16>, vector<16x128xf32> -> vector<16x128xf32>
    %82 = vector.extract_strided_slice %1 {offsets = [6, 0], sizes = [1, 128], strides = [1, 1]} : vector<8x128xf32> to vector<1x128xf32>
    %83 = vector.broadcast %82 : vector<1x128xf32> to vector<16x128xf32>
    %84 = arith.addf %81, %83 : vector<16x128xf32>
    %cst_35 = arith.constant 5.000000e-01 : f32
    %85 = vector.broadcast %cst_35 : f32 to vector<16x128xf32>
    %86 = arith.mulf %85, %84 : vector<16x128xf32>
    %87 = math.tanh %86 : vector<16x128xf32>
    %cst_36 = arith.constant 5.000000e-01 : f32
    %88 = vector.broadcast %cst_36 : f32 to vector<16x128xf32>
    %89 = arith.mulf %88, %87 : vector<16x128xf32>
    %cst_37 = arith.constant 5.000000e-01 : f32
    %90 = vector.broadcast %cst_37 : f32 to vector<16x128xf32>
    %91 = arith.addf %89, %90 : vector<16x128xf32>
    %92 = arith.truncf %91 : vector<16x128xf32> to vector<16x128xbf16>
    %c944 = arith.constant 944 : index
    %c0_38 = arith.constant 0 : index
    %93 = vector.load %arg2[%c944, %c0_38] : memref<1072x128xbf16, #tpu.memory_space<vmem>>, vector<128x128xbf16>
    %cst_39 = arith.constant dense<0.000000e+00> : vector<16x128xf32>
    %94 = tpu.matmul %92, %93, %cst_39 {dimension_numbers = #tpu.dot_dimension_numbers<[1], [0], [0], [1], [0, 0, 1, 1], [], []>} : vector<16x128xbf16>, vector<128x128xbf16>, vector<16x128xf32> -> vector<16x128xf32>
    %95 = vector.extract_strided_slice %1 {offsets = [7, 0], sizes = [1, 128], strides = [1, 1]} : vector<8x128xf32> to vector<1x128xf32>
    %96 = vector.broadcast %95 : vector<1x128xf32> to vector<16x128xf32>
    %97 = arith.addf %94, %96 : vector<16x128xf32>
    %cst_40 = arith.constant 5.000000e-01 : f32
    %98 = vector.broadcast %cst_40 : f32 to vector<16x128xf32>
    %99 = arith.mulf %98, %97 : vector<16x128xf32>
    %100 = math.tanh %99 : vector<16x128xf32>
    %cst_41 = arith.constant 5.000000e-01 : f32
    %101 = vector.broadcast %cst_41 : f32 to vector<16x128xf32>
    %102 = arith.mulf %101, %100 : vector<16x128xf32>
    %cst_42 = arith.constant 5.000000e-01 : f32
    %103 = vector.broadcast %cst_42 : f32 to vector<16x128xf32>
    %104 = arith.addf %102, %103 : vector<16x128xf32>
    %105 = arith.truncf %104 : vector<16x128xf32> to vector<16x128xbf16>
    %c0_43 = arith.constant 0 : index
    %c0_44 = arith.constant 0 : index
    %106 = vector.load %arg4[%c0_43, %c0_44] : memref<16x128xbf16, #tpu.memory_space<vmem>>, vector<16x128xbf16>
    tpu.vector_store %arg4[%c0_43, %c0_44], %105 {strides = array<i32>} : memref<16x128xbf16, #tpu.memory_space<vmem>>, vector<16x128xbf16>,
    return
  }
  func.func @transform_0(%arg0: i32) -> (i32, i32) {
    %c0_i32 = arith.constant 0 : i32
    %c0_i32_0 = arith.constant 0 : i32
    return %arg0, %c0_i32 : i32, i32
  }
  func.func @transform_1(%arg0: i32) -> (i32, i32) {
    %c0_i32 = arith.constant 0 : i32
    %c0_i32_0 = arith.constant 0 : i32
    %c0_i32_1 = arith.constant 0 : i32
    return %c0_i32, %c0_i32_0 : i32, i32
  }
  func.func @transform_2(%arg0: i32) -> (i32, i32) {
    %c0_i32 = arith.constant 0 : i32
    %c0_i32_0 = arith.constant 0 : i32
    %c0_i32_1 = arith.constant 0 : i32
    return %c0_i32, %c0_i32_0 : i32, i32
  }
  func.func @transform_3(%arg0: i32) -> (i32, i32) {
    %c0_i32 = arith.constant 0 : i32
    %c0_i32_0 = arith.constant 0 : i32
    return %arg0, %c0_i32 : i32, i32
  }
}

</mosaic_0001>

<llo_original>
// kernel: neural_net_forward.1
$region0: #{neural_net_forward.1}
  #allocation0 [shape = 'u32[]', space=smem, size = 0x4, offset = 0x4, fixed_abs, tag = 'smem constant byte address 0x4 - core index']
  #allocation1 [shape = 'u32[144,128]{1,0:T(1,128)}', space=vmem, size = 0x12000, scoped, tag = 'internal scratch']
  %s0 = inlined_call_operand.vmem [shape: bf16[16,176], index: 0, kind: input, shape index: {}]
  %s1 = inlined_call_operand.hbm [shape: bf16[1072,128], index: 1, kind: input, shape index: {}]
  %s2 = inlined_call_operand.vmem [shape: f32[8,128], index: 2, kind: input, shape index: {}]
  %s3 = inlined_call_operand.vmem [shape: bf16[16,128], index: 3, kind: output, shape index: {}]
  %s4 = sld [smem:[#allocation0]]
  $region26: #{neural_net_forward.1} parent=0
    _
  %s6 = ssub.s32 1, %s4
  %s7 = scalar_select 0, %s6, %s4
  $region1: #{neural_net_forward.1} parent=0
    #allocation2 [shape = 'u8[274432]{0}', space=vmem, size = 0x43000, scoped, tag = 'input window, operand 1, single buffered']
    #allocation3 [shape = 's32[1]{0}', space=sflag, size = 0x4, scoped, tag = 'scoped memory for neural_net_forward.1']
    %8 = vsyncpa [#allocation3], 0
    // Predicated region
    $region2: #{neural_net_forward.1} parent=1 // pred_check
      _
    $region3: #{neural_net_forward.1} parent=1 // pred_check_branch
      %10 = sbr.rel (0) target = $region5
    $region4: #{neural_net_forward.1} parent=1 // pred_region
      _
    $region5: #{neural_net_forward.1} parent=1 // pred_fallthru
      _
    // Predicated region
    $region6: #{neural_net_forward.1} parent=1 // pred_check
      _
    $region7: #{neural_net_forward.1} parent=1 // pred_check_branch
      %12 = sbr.rel (0) target = $region9
    $region8: #{neural_net_forward.1} parent=1 // pred_region
      %s14 = ssub.s32 8576, 8576
      %15 = vsyncadd [#allocation3], %s14
      %s16 = sshll.u32 [#allocation2], 4
      %s17 = int_to_ptr.vmem [resolvable:$true] %s16
      %22 = dma.hbm_to_vmem [thread:$0]  %s1, 8576, %s17, [#allocation3], 64, 64, 4
    $region9: #{neural_net_forward.1} parent=1 // pred_fallthru
      _
    // Predicated region
    $region10: #{neural_net_forward.1} parent=1 // pred_check
      _
    $region11: #{neural_net_forward.1} parent=1 // pred_check_branch
      %24 = sbr.rel (0) target = $region13
    $region12: #{neural_net_forward.1} parent=1 // pred_region
      _
    $region13: #{neural_net_forward.1} parent=1 // pred_fallthru
      _
    // Predicated region
    $region14: #{neural_net_forward.1} parent=1 // pred_check
      _
    $region15: #{neural_net_forward.1} parent=1 // pred_check_branch
      %26 = sbr.rel (0) target = $region17
    $region16: #{neural_net_forward.1} parent=1 // pred_region
      %27 = dma.done [#allocation3], 8576
    $region17: #{neural_net_forward.1} parent=1 // pred_fallthru
      _
    %v29 = vld [vmem:[%s0] sm:$0xff]
    %v30 = vld [vmem:[%s0 + $0x8] sm:$0xff]
    %v31 = vld [vmem:[%s2] sm:$0xff]
    %v32 = vld [vmem:[#allocation2] sm:$0xf]
    %v33 = vld [vmem:[#allocation2 + $0x4] sm:$0xf]
    %v34 = vld [vmem:[#allocation2 + $0x8] sm:$0xf]
    %v35 = vld [vmem:[#allocation2 + $0xc] sm:$0xf]
    %v36 = vld [vmem:[#allocation2 + $0x10] sm:$0xf]
    %v37 = vld [vmem:[#allocation2 + $0x14] sm:$0xf]
    %v38 = vld [vmem:[#allocation2 + $0x18] sm:$0xf]
    %v39 = vld [vmem:[#allocation2 + $0x1c] sm:$0xf]
    %v40 = vld [vmem:[#allocation2 + $0x20] sm:$0xf]
    %v41 = vld [vmem:[#allocation2 + $0x24] sm:$0xf]
    %v42 = vld [vmem:[#allocation2 + $0x28] sm:$0xf]
    %v43 = vld [vmem:[#allocation2 + $0x2c] sm:$0xf]
    %v44 = vld [vmem:[#allocation2 + $0x30] sm:$0xf]
    %v45 = vld [vmem:[#allocation2 + $0x34] sm:$0xf]
    %v46 = vld [vmem:[#allocation2 + $0x38] sm:$0xf]
    %v47 = vld [vmem:[#allocation2 + $0x3c] sm:$0xf]
    %v48 = vld [vmem:[#allocation2 + $0x40] sm:$0xf]
    %v49 = vld [vmem:[#allocation2 + $0x44] sm:$0xf]
    %v50 = vld [vmem:[#allocation2 + $0x48] sm:$0xf]
    %v51 = vld [vmem:[#allocation2 + $0x4c] sm:$0xf]
    %v52 = vld [vmem:[#allocation2 + $0x50] sm:$0xf]
    %v53 = vld [vmem:[#allocation2 + $0x54] sm:$0xf]
    %v54 = vlaneseq
    %v55 = vshrl.u32 %v54, 7
    %v56 = vsub.s32 0, %v55
    %v57 = vrot.slane %v31, %v56
    %v60 = vunpack.c.l.b16 %v29
    %v61 = vunpack.c.h.b16 %v29
    %v62 = vunpack.c.l.b16 %v30
    %v63 = vunpack.c.h.b16 %v30
    %v64 = vpack.c.b16 %v62, %v60
    %v65 = vpack.c.b16 %v63, %v61
    %v89 = vunpack.c.l.b16 %v32
    %v90 = vunpack.c.l.b16 %v33
    %v91 = vunpack.c.l.b16 %v34
    %v92 = vunpack.c.l.b16 %v35
    %v93 = vunpack.c.l.b16 %v36
    %v94 = vunpack.c.l.b16 %v37
    %v95 = vunpack.c.l.b16 %v38
    %v96 = vunpack.c.l.b16 %v39
    %v97 = vunpack.c.l.b16 %v40
    %v98 = vunpack.c.l.b16 %v41
    %v99 = vunpack.c.l.b16 %v42
    %v100 = vunpack.c.l.b16 %v43
    %v101 = vunpack.c.l.b16 %v44
    %v102 = vunpack.c.l.b16 %v45
    %v103 = vunpack.c.l.b16 %v46
    %v104 = vunpack.c.l.b16 %v47
    %v105 = vunpack.c.l.b16 %v48
    %v106 = vunpack.c.l.b16 %v49
    %v107 = vunpack.c.l.b16 %v50
    %v108 = vunpack.c.l.b16 %v51
    %v109 = vunpack.c.l.b16 %v52
    %v110 = vunpack.c.l.b16 %v53
    %v111 = vpack.c.b16 %v90, %v89
    %v112 = vpack.c.b16 %v92, %v91
    %v113 = vpack.c.b16 %v94, %v93
    %v114 = vpack.c.b16 %v96, %v95
    %v115 = vpack.c.b16 %v98, %v97
    %v116 = vpack.c.b16 %v100, %v99
    %v117 = vpack.c.b16 %v102, %v101
    %v118 = vpack.c.b16 %v104, %v103
    %v119 = vpack.c.b16 %v106, %v105
    %v120 = vpack.c.b16 %v108, %v107
    %v121 = vpack.c.b16 %v110, %v109
    %vm133 = vcmask 392192
    %v135 = vsel %vm133, %v65, 0
    %137 = vmatprep.subr.bf16.mxu0 0
    %138 = vmatpush1.bf16.msra.mxu0 %v118
    %139 = vmatprep.subr.bf16.mxu0 0
    %140 = vmatpush1.bf16.msra.mxu0 %v117
    %141 = vmatprep.subr.bf16.mxu0 0
    %142 = vmatpush1.bf16.msra.mxu0 %v116
    %143 = vmatprep.subr.bf16.mxu0 0
    %144 = vmatpush1.bf16.msra.mxu0 %v115
    %145 = vmatprep.subr.bf16.mxu0 0
    %146 = vmatpush1.bf16.msra.mxu0 %v114
    %147 = vmatprep.subr.bf16.mxu0 0
    %148 = vmatpush1.bf16.msra.mxu0 %v113
    %149 = vmatprep.subr.bf16.mxu0 0
    %150 = vmatpush1.bf16.msra.mxu0 %v112
    %151 = vmatprep.subr.bf16.mxu0 0
    %152 = vmatpush1.bf16.msra.mxu0 %v111
    %153 = vmatprep.subr.bf16.mxu0 0
    %154 = vmatpush2.bf16.msra.mxu0 0
    %155 = vmatprep.subr.bf16.mxu0 0
    %156 = vmatpush2.bf16.msra.mxu0 0
    %157 = vmatprep.subr.bf16.mxu0 0
    %158 = vmatpush2.bf16.msra.mxu0 0
    %159 = vmatprep.subr.bf16.mxu0 0
    %160 = vmatpush2.bf16.msra.mxu0 0
    %161 = vmatprep.subr.bf16.mxu0 0
    %162 = vmatpush2.bf16.msra.mxu0 0
    %163 = vmatprep.subr.bf16.mxu0 0
    %164 = vmatpush2.bf16.msra.mxu0 %v121
    %165 = vmatprep.subr.bf16.mxu0 0
    %166 = vmatpush2.bf16.msra.mxu0 %v120
    %167 = vmatprep.subr.bf16.mxu0 0
    %168 = vmatpush2.bf16.msra.mxu0 %v119
    %169 = vmatprep.mubr.bf16.mxu0 %v135
    %170 = vmatmul.mubr.bf16.gmra.mxu0 %v64
    %v171 = vpop.f32.mrf.mxu0
    %v172 = vadd.f32 %v57, %v171
    %v173 = vpop.f32.mrf.mxu0
    %v174 = vpop.f32.mrf.mxu0
    %v175 = vadd.f32 %v57, %v174
    %v176 = vpop.f32.mrf.mxu0
    %177 = vdwg.mxu0
    %v178 = vmul.f32 %v172, 0.5
    %v179 = vmul.f32 %v175, 0.5
    %v180 = vtanh.pop %v178
    %v181 = vtanh.pop %v179
    %v182 = vmul.f32 %v180, 0.5
    %v183 = vmul.f32 %v181, 0.5
    %v184 = vadd.f32 %v182, 0.5
    %v185 = vadd.f32 %v183, 0.5
    %v186 = vpack.c.bf16 %v185, %v184
    %v187 = vld [vmem:[#allocation2 + $0x58] sm:$0xf]
    %v188 = vld [vmem:[#allocation2 + $0x5c] sm:$0xf]
    %v189 = vld [vmem:[#allocation2 + $0x60] sm:$0xf]
    %v190 = vld [vmem:[#allocation2 + $0x64] sm:$0xf]
    %v191 = vld [vmem:[#allocation2 + $0x68] sm:$0xf]
    %v192 = vld [vmem:[#allocation2 + $0x6c] sm:$0xf]
    %v193 = vld [vmem:[#allocation2 + $0x70] sm:$0xf]
    %v194 = vld [vmem:[#allocation2 + $0x74] sm:$0xf]
    %v195 = vld [vmem:[#allocation2 + $0x78] sm:$0xf]
    %v196 = vld [vmem:[#allocation2 + $0x7c] sm:$0xf]
    %v197 = vld [vmem:[#allocation2 + $0x80] sm:$0xf]
    %v198 = vld [vmem:[#allocation2 + $0x84] sm:$0xf]
    %v199 = vld [vmem:[#allocation2 + $0x88] sm:$0xf]
    %v200 = vld [vmem:[#allocation2 + $0x8c] sm:$0xf]
    %v201 = vld [vmem:[#allocation2 + $0x90] sm:$0xf]
    %v202 = vld [vmem:[#allocation2 + $0x94] sm:$0xf]
    %v203 = vlaneseq
    %v204 = vshrl.u32 %v203, 7
    %v205 = vsub.s32 1, %v204
    %v206 = vrot.slane %v31, %v205
    %v223 = vunpack.c.l.b16 %v187
    %v224 = vunpack.c.l.b16 %v188
    %v225 = vunpack.c.l.b16 %v189
    %v226 = vunpack.c.l.b16 %v190
    %v227 = vunpack.c.l.b16 %v191
    %v228 = vunpack.c.l.b16 %v192
    %v229 = vunpack.c.l.b16 %v193
    %v230 = vunpack.c.l.b16 %v194
    %v231 = vunpack.c.l.b16 %v195
    %v232 = vunpack.c.l.b16 %v196
    %v233 = vunpack.c.l.b16 %v197
    %v234 = vunpack.c.l.b16 %v198
    %v235 = vunpack.c.l.b16 %v199
    %v236 = vunpack.c.l.b16 %v200
    %v237 = vunpack.c.l.b16 %v201
    %v238 = vunpack.c.l.b16 %v202
    %v239 = vpack.c.b16 %v224, %v223
    %v240 = vpack.c.b16 %v226, %v225
    %v241 = vpack.c.b16 %v228, %v227
    %v242 = vpack.c.b16 %v230, %v229
    %v243 = vpack.c.b16 %v232, %v231
    %v244 = vpack.c.b16 %v234, %v233
    %v245 = vpack.c.b16 %v236, %v235
    %v246 = vpack.c.b16 %v238, %v237
    %255 = vmatprep.subr.bf16.mxu0 0
    %256 = vmatpush1.bf16.msra.mxu0 %v246
    %257 = vmatprep.subr.bf16.mxu0 0
    %258 = vmatpush1.bf16.msra.mxu0 %v245
    %259 = vmatprep.subr.bf16.mxu0 0
    %260 = vmatpush1.bf16.msra.mxu0 %v244
    %261 = vmatprep.subr.bf16.mxu0 0
    %262 = vmatpush1.bf16.msra.mxu0 %v243
    %263 = vmatprep.subr.bf16.mxu0 0
    %264 = vmatpush1.bf16.msra.mxu0 %v242
    %265 = vmatprep.subr.bf16.mxu0 0
    %266 = vmatpush1.bf16.msra.mxu0 %v241
    %267 = vmatprep.subr.bf16.mxu0 0
    %268 = vmatpush1.bf16.msra.mxu0 %v240
    %269 = vmatprep.subr.bf16.mxu0 0
    %270 = vmatpush1.bf16.msra.mxu0 %v239
    %271 = vmatprep.subr.bf16.mxu0 0
    %272 = vmatpush2.bf16.msra.mxu0 0
    %273 = vmatprep.subr.bf16.mxu0 0
    %274 = vmatpush2.bf16.msra.mxu0 0
    %275 = vmatprep.subr.bf16.mxu0 0
    %276 = vmatpush2.bf16.msra.mxu0 0
    %277 = vmatprep.subr.bf16.mxu0 0
    %278 = vmatpush2.bf16.msra.mxu0 0
    %279 = vmatprep.subr.bf16.mxu0 0
    %280 = vmatpush2.bf16.msra.mxu0 0
    %281 = vmatprep.subr.bf16.mxu0 0
    %282 = vmatpush2.bf16.msra.mxu0 0
    %283 = vmatprep.subr.bf16.mxu0 0
    %284 = vmatpush2.bf16.msra.mxu0 0
    %285 = vmatprep.subr.bf16.mxu0 0
    %286 = vmatpush2.bf16.msra.mxu0 0
    %287 = vmatprep.mubr.bf16.mxu0 0
    %288 = vmatmul.mubr.bf16.gmra.mxu0 %v186
    %v289 = vpop.f32.mrf.mxu0
    %v290 = vadd.f32 %v206, %v289
    %v291 = vpop.f32.mrf.mxu0
    %v292 = vpop.f32.mrf.mxu0
    %v293 = vadd.f32 %v206, %v292
    %v294 = vpop.f32.mrf.mxu0
    %295 = vdwg.mxu0
    %v296 = vmul.f32 %v290, 0.5
    %v297 = vmul.f32 %v293, 0.5
    %v298 = vtanh.pop %v296
    %v299 = vtanh.pop %v297
    %v300 = vmul.f32 %v298, 0.5
    %v301 = vmul.f32 %v299, 0.5
    %v302 = vadd.f32 %v300, 0.5
    %v303 = vadd.f32 %v301, 0.5
    %v304 = vpack.c.bf16 %v303, %v302
    %v305 = vld [vmem:[#allocation2 + $0x98] sm:$0xf]
    %v306 = vld [vmem:[#allocation2 + $0x9c] sm:$0xf]
    %v307 = vld [vmem:[#allocation2 + $0xa0] sm:$0xf]
    %v308 = vld [vmem:[#allocation2 + $0xa4] sm:$0xf]
    %v309 = vld [vmem:[#allocation2 + $0xa8] sm:$0xf]
    %v310 = vld [vmem:[#allocation2 + $0xac] sm:$0xf]
    %v311 = vld [vmem:[#allocation2 + $0xb0] sm:$0xf]
    %v312 = vld [vmem:[#allocation2 + $0xb4] sm:$0xf]
    %v313 = vld [vmem:[#allocation2 + $0xb8] sm:$0xf]
    %v314 = vld [vmem:[#allocation2 + $0xbc] sm:$0xf]
    %v315 = vld [vmem:[#allocation2 + $0xc0] sm:$0xf]
    %v316 = vld [vmem:[#allocation2 + $0xc4] sm:$0xf]
    %v317 = vld [vmem:[#allocation2 + $0xc8] sm:$0xf]
    %v318 = vld [vmem:[#allocation2 + $0xcc] sm:$0xf]
    %v319 = vld [vmem:[#allocation2 + $0xd0] sm:$0xf]
    %v320 = vld [vmem:[#allocation2 + $0xd4] sm:$0xf]
    %v321 = vlaneseq
    %v322 = vshrl.u32 %v321, 7
    %v323 = vsub.s32 2, %v322
    %v324 = vrot.slane %v31, %v323
    %v341 = vunpack.c.l.b16 %v305
    %v342 = vunpack.c.l.b16 %v306
    %v343 = vunpack.c.l.b16 %v307
    %v344 = vunpack.c.l.b16 %v308
    %v345 = vunpack.c.l.b16 %v309
    %v346 = vunpack.c.l.b16 %v310
    %v347 = vunpack.c.l.b16 %v311
    %v348 = vunpack.c.l.b16 %v312
    %v349 = vunpack.c.l.b16 %v313
    %v350 = vunpack.c.l.b16 %v314
    %v351 = vunpack.c.l.b16 %v315
    %v352 = vunpack.c.l.b16 %v316
    %v353 = vunpack.c.l.b16 %v317
    %v354 = vunpack.c.l.b16 %v318
    %v355 = vunpack.c.l.b16 %v319
    %v356 = vunpack.c.l.b16 %v320
    %v357 = vpack.c.b16 %v342, %v341
    %v358 = vpack.c.b16 %v344, %v343
    %v359 = vpack.c.b16 %v346, %v345
    %v360 = vpack.c.b16 %v348, %v347
    %v361 = vpack.c.b16 %v350, %v349
    %v362 = vpack.c.b16 %v352, %v351
    %v363 = vpack.c.b16 %v354, %v353
    %v364 = vpack.c.b16 %v356, %v355
    %373 = vmatprep.subr.bf16.mxu0 0
    %374 = vmatpush1.bf16.msra.mxu0 %v364
    %375 = vmatprep.subr.bf16.mxu0 0
    %376 = vmatpush1.bf16.msra.mxu0 %v363
    %377 = vmatprep.subr.bf16.mxu0 0
    %378 = vmatpush1.bf16.msra.mxu0 %v362
    %379 = vmatprep.subr.bf16.mxu0 0
    %380 = vmatpush1.bf16.msra.mxu0 %v361
    %381 = vmatprep.subr.bf16.mxu0 0
    %382 = vmatpush1.bf16.msra.mxu0 %v360
    %383 = vmatprep.subr.bf16.mxu0 0
    %384 = vmatpush1.bf16.msra.mxu0 %v359
    %385 = vmatprep.subr.bf16.mxu0 0
    %386 = vmatpush1.bf16.msra.mxu0 %v358
    %387 = vmatprep.subr.bf16.mxu0 0
    %388 = vmatpush1.bf16.msra.mxu0 %v357
    %389 = vmatprep.subr.bf16.mxu0 0
    %390 = vmatpush2.bf16.msra.mxu0 0
    %391 = vmatprep.subr.bf16.mxu0 0
    %392 = vmatpush2.bf16.msra.mxu0 0
    %393 = vmatprep.subr.bf16.mxu0 0
    %394 = vmatpush2.bf16.msra.mxu0 0
    %395 = vmatprep.subr.bf16.mxu0 0
    %396 = vmatpush2.bf16.msra.mxu0 0
    %397 = vmatprep.subr.bf16.mxu0 0
    %398 = vmatpush2.bf16.msra.mxu0 0
    %399 = vmatprep.subr.bf16.mxu0 0
    %400 = vmatpush2.bf16.msra.mxu0 0
    %401 = vmatprep.subr.bf16.mxu0 0
    %402 = vmatpush2.bf16.msra.mxu0 0
    %403 = vmatprep.subr.bf16.mxu0 0
    %404 = vmatpush2.bf16.msra.mxu0 0
    %405 = vmatprep.mubr.bf16.mxu0 0
    %406 = vmatmul.mubr.bf16.gmra.mxu0 %v304
    %v407 = vpop.f32.mrf.mxu0
    %v408 = vadd.f32 %v324, %v407
    %v409 = vpop.f32.mrf.mxu0
    %v410 = vpop.f32.mrf.mxu0
    %v411 = vadd.f32 %v324, %v410
    %v412 = vpop.f32.mrf.mxu0
    %413 = vdwg.mxu0
    %v414 = vmul.f32 %v408, 0.5
    %v415 = vmul.f32 %v411, 0.5
    %v416 = vtanh.pop %v414
    %v417 = vtanh.pop %v415
    %v418 = vmul.f32 %v416, 0.5
    %v419 = vmul.f32 %v417, 0.5
    %v420 = vadd.f32 %v418, 0.5
    %v421 = vadd.f32 %v419, 0.5
    %v422 = vpack.c.bf16 %v421, %v420
    %v423 = vld [vmem:[#allocation2 + $0xd8] sm:$0xf]
    %v424 = vld [vmem:[#allocation2 + $0xdc] sm:$0xf]
    %v425 = vld [vmem:[#allocation2 + $0xe0] sm:$0xf]
    %v426 = vld [vmem:[#allocation2 + $0xe4] sm:$0xf]
    %v427 = vld [vmem:[#allocation2 + $0xe8] sm:$0xf]
    %v428 = vld [vmem:[#allocation2 + $0xec] sm:$0xf]
    %v429 = vld [vmem:[#allocation2 + $0xf0] sm:$0xf]
    %v430 = vld [vmem:[#allocation2 + $0xf4] sm:$0xf]
    %v431 = vld [vmem:[#allocation2 + $0xf8] sm:$0xf]
    %v432 = vld [vmem:[#allocation2 + $0xfc] sm:$0xf]
    %v433 = vld [vmem:[#allocation2 + $0x100] sm:$0xf]
    %v434 = vld [vmem:[#allocation2 + $0x104] sm:$0xf]
    %v435 = vld [vmem:[#allocation2 + $0x108] sm:$0xf]
    %v436 = vld [vmem:[#allocation2 + $0x10c] sm:$0xf]
    %v437 = vld [vmem:[#allocation2 + $0x110] sm:$0xf]
    %v438 = vld [vmem:[#allocation2 + $0x114] sm:$0xf]
    %v439 = vlaneseq
    %v440 = vshrl.u32 %v439, 7
    %v441 = vsub.s32 3, %v440
    %v442 = vrot.slane %v31, %v441
    %v459 = vunpack.c.l.b16 %v423
    %v460 = vunpack.c.l.b16 %v424
    %v461 = vunpack.c.l.b16 %v425
    %v462 = vunpack.c.l.b16 %v426
    %v463 = vunpack.c.l.b16 %v427
    %v464 = vunpack.c.l.b16 %v428
    %v465 = vunpack.c.l.b16 %v429
    %v466 = vunpack.c.l.b16 %v430
    %v467 = vunpack.c.l.b16 %v431
    %v468 = vunpack.c.l.b16 %v432
    %v469 = vunpack.c.l.b16 %v433
    %v470 = vunpack.c.l.b16 %v434
    %v471 = vunpack.c.l.b16 %v435
    %v472 = vunpack.c.l.b16 %v436
    %v473 = vunpack.c.l.b16 %v437
    %v474 = vunpack.c.l.b16 %v438
    %v475 = vpack.c.b16 %v460, %v459
    %v476 = vpack.c.b16 %v462, %v461
    %v477 = vpack.c.b16 %v464, %v463
    %v478 = vpack.c.b16 %v466, %v465
    %v479 = vpack.c.b16 %v468, %v467
    %v480 = vpack.c.b16 %v470, %v469
    %v481 = vpack.c.b16 %v472, %v471
    %v482 = vpack.c.b16 %v474, %v473
    %491 = vmatprep.subr.bf16.mxu0 0
    %492 = vmatpush1.bf16.msra.mxu0 %v482
    %493 = vmatprep.subr.bf16.mxu0 0
    %494 = vmatpush1.bf16.msra.mxu0 %v481
    %495 = vmatprep.subr.bf16.mxu0 0
    %496 = vmatpush1.bf16.msra.mxu0 %v480
    %497 = vmatprep.subr.bf16.mxu0 0
    %498 = vmatpush1.bf16.msra.mxu0 %v479
    %499 = vmatprep.subr.bf16.mxu0 0
    %500 = vmatpush1.bf16.msra.mxu0 %v478
    %501 = vmatprep.subr.bf16.mxu0 0
    %502 = vmatpush1.bf16.msra.mxu0 %v477
    %503 = vmatprep.subr.bf16.mxu0 0
    %504 = vmatpush1.bf16.msra.mxu0 %v476
    %505 = vmatprep.subr.bf16.mxu0 0
    %506 = vmatpush1.bf16.msra.mxu0 %v475
    %507 = vmatprep.subr.bf16.mxu0 0
    %508 = vmatpush2.bf16.msra.mxu0 0
    %509 = vmatprep.subr.bf16.mxu0 0
    %510 = vmatpush2.bf16.msra.mxu0 0
    %511 = vmatprep.subr.bf16.mxu0 0
    %512 = vmatpush2.bf16.msra.mxu0 0
    %513 = vmatprep.subr.bf16.mxu0 0
    %514 = vmatpush2.bf16.msra.mxu0 0
    %515 = vmatprep.subr.bf16.mxu0 0
    %516 = vmatpush2.bf16.msra.mxu0 0
    %517 = vmatprep.subr.bf16.mxu0 0
    %518 = vmatpush2.bf16.msra.mxu0 0
    %519 = vmatprep.subr.bf16.mxu0 0
    %520 = vmatpush2.bf16.msra.mxu0 0
    %521 = vmatprep.subr.bf16.mxu0 0
    %522 = vmatpush2.bf16.msra.mxu0 0
    %523 = vmatprep.mubr.bf16.mxu0 0
    %524 = vmatmul.mubr.bf16.gmra.mxu0 %v422
    %v525 = vpop.f32.mrf.mxu0
    %v526 = vadd.f32 %v442, %v525
    %v527 = vpop.f32.mrf.mxu0
    %v528 = vpop.f32.mrf.mxu0
    %v529 = vadd.f32 %v442, %v528
    %v530 = vpop.f32.mrf.mxu0
    %531 = vdwg.mxu0
    %v532 = vmul.f32 %v526, 0.5
    %v533 = vmul.f32 %v529, 0.5
    %v534 = vtanh.pop %v532
    %v535 = vtanh.pop %v533
    %v536 = vmul.f32 %v534, 0.5
    %v537 = vmul.f32 %v535, 0.5
    %v538 = vadd.f32 %v536, 0.5
    %v539 = vadd.f32 %v537, 0.5
    %v540 = vpack.c.bf16 %v539, %v538
    %v541 = vld [vmem:[#allocation2 + $0x118] sm:$0xf]
    %v542 = vld [vmem:[#allocation2 + $0x11c] sm:$0xf]
    %v543 = vld [vmem:[#allocation2 + $0x120] sm:$0xf]
    %v544 = vld [vmem:[#allocation2 + $0x124] sm:$0xf]
    %v545 = vld [vmem:[#allocation2 + $0x128] sm:$0xf]
    %v546 = vld [vmem:[#allocation2 + $0x12c] sm:$0xf]
    %v547 = vld [vmem:[#allocation2 + $0x130] sm:$0xf]
    %v548 = vld [vmem:[#allocation2 + $0x134] sm:$0xf]
    %v549 = vld [vmem:[#allocation2 + $0x138] sm:$0xf]
    %v550 = vld [vmem:[#allocation2 + $0x13c] sm:$0xf]
    %v551 = vld [vmem:[#allocation2 + $0x140] sm:$0xf]
    %v552 = vld [vmem:[#allocation2 + $0x144] sm:$0xf]
    %v553 = vld [vmem:[#allocation2 + $0x148] sm:$0xf]
    %v554 = vld [vmem:[#allocation2 + $0x14c] sm:$0xf]
    %v555 = vld [vmem:[#allocation2 + $0x150] sm:$0xf]
    %v556 = vld [vmem:[#allocation2 + $0x154] sm:$0xf]
    %v557 = vlaneseq
    %v558 = vshrl.u32 %v557, 7
    %v559 = vsub.s32 4, %v558
    %v560 = vrot.slane %v31, %v559
    %v577 = vunpack.c.l.b16 %v541
    %v578 = vunpack.c.l.b16 %v542
    %v579 = vunpack.c.l.b16 %v543
    %v580 = vunpack.c.l.b16 %v544
    %v581 = vunpack.c.l.b16 %v545
    %v582 = vunpack.c.l.b16 %v546
    %v583 = vunpack.c.l.b16 %v547
    %v584 = vunpack.c.l.b16 %v548
    %v585 = vunpack.c.l.b16 %v549
    %v586 = vunpack.c.l.b16 %v550
    %v587 = vunpack.c.l.b16 %v551
    %v588 = vunpack.c.l.b16 %v552
    %v589 = vunpack.c.l.b16 %v553
    %v590 = vunpack.c.l.b16 %v554
    %v591 = vunpack.c.l.b16 %v555
    %v592 = vunpack.c.l.b16 %v556
    %v593 = vpack.c.b16 %v578, %v577
    %v594 = vpack.c.b16 %v580, %v579
    %v595 = vpack.c.b16 %v582, %v581
    %v596 = vpack.c.b16 %v584, %v583
    %v597 = vpack.c.b16 %v586, %v585
    %v598 = vpack.c.b16 %v588, %v587
    %v599 = vpack.c.b16 %v590, %v589
    %v600 = vpack.c.b16 %v592, %v591
    %609 = vmatprep.subr.bf16.mxu0 0
    %610 = vmatpush1.bf16.msra.mxu0 %v600
    %611 = vmatprep.subr.bf16.mxu0 0
    %612 = vmatpush1.bf16.msra.mxu0 %v599
    %613 = vmatprep.subr.bf16.mxu0 0
    %614 = vmatpush1.bf16.msra.mxu0 %v598
    %615 = vmatprep.subr.bf16.mxu0 0
    %616 = vmatpush1.bf16.msra.mxu0 %v597
    %617 = vmatprep.subr.bf16.mxu0 0
    %618 = vmatpush1.bf16.msra.mxu0 %v596
    %619 = vmatprep.subr.bf16.mxu0 0
    %620 = vmatpush1.bf16.msra.mxu0 %v595
    %621 = vmatprep.subr.bf16.mxu0 0
    %622 = vmatpush1.bf16.msra.mxu0 %v594
    %623 = vmatprep.subr.bf16.mxu0 0
    %624 = vmatpush1.bf16.msra.mxu0 %v593
    %625 = vmatprep.subr.bf16.mxu0 0
    %626 = vmatpush2.bf16.msra.mxu0 0
    %627 = vmatprep.subr.bf16.mxu0 0
    %628 = vmatpush2.bf16.msra.mxu0 0
    %629 = vmatprep.subr.bf16.mxu0 0
    %630 = vmatpush2.bf16.msra.mxu0 0
    %631 = vmatprep.subr.bf16.mxu0 0
    %632 = vmatpush2.bf16.msra.mxu0 0
    %633 = vmatprep.subr.bf16.mxu0 0
    %634 = vmatpush2.bf16.msra.mxu0 0
    %635 = vmatprep.subr.bf16.mxu0 0
    %636 = vmatpush2.bf16.msra.mxu0 0
    %637 = vmatprep.subr.bf16.mxu0 0
    %638 = vmatpush2.bf16.msra.mxu0 0
    %639 = vmatprep.subr.bf16.mxu0 0
    %640 = vmatpush2.bf16.msra.mxu0 0
    %641 = vmatprep.mubr.bf16.mxu0 0
    %642 = vmatmul.mubr.bf16.gmra.mxu0 %v540
    %v643 = vpop.f32.mrf.mxu0
    %v644 = vadd.f32 %v560, %v643
    %v645 = vpop.f32.mrf.mxu0
    %v646 = vpop.f32.mrf.mxu0
    %v647 = vadd.f32 %v560, %v646
    %v648 = vpop.f32.mrf.mxu0
    %649 = vdwg.mxu0
    %v650 = vmul.f32 %v644, 0.5
    %v651 = vmul.f32 %v647, 0.5
    %v652 = vtanh.pop %v650
    %v653 = vtanh.pop %v651
    %v654 = vmul.f32 %v652, 0.5
    %v655 = vmul.f32 %v653, 0.5
    %v656 = vadd.f32 %v654, 0.5
    %v657 = vadd.f32 %v655, 0.5
    %v658 = vpack.c.bf16 %v657, %v656
    %v659 = vld [vmem:[#allocation2 + $0x158] sm:$0xf]
    %v660 = vld [vmem:[#allocation2 + $0x15c] sm:$0xf]
    %v661 = vld [vmem:[#allocation2 + $0x160] sm:$0xf]
    %v662 = vld [vmem:[#allocation2 + $0x164] sm:$0xf]
    %v663 = vld [vmem:[#allocation2 + $0x168] sm:$0xf]
    %v664 = vld [vmem:[#allocation2 + $0x16c] sm:$0xf]
    %v665 = vld [vmem:[#allocation2 + $0x170] sm:$0xf]
    %v666 = vld [vmem:[#allocation2 + $0x174] sm:$0xf]
    %v667 = vld [vmem:[#allocation2 + $0x178] sm:$0xf]
    %v668 = vld [vmem:[#allocation2 + $0x17c] sm:$0xf]
    %v669 = vld [vmem:[#allocation2 + $0x180] sm:$0xf]
    %v670 = vld [vmem:[#allocation2 + $0x184] sm:$0xf]
    %v671 = vld [vmem:[#allocation2 + $0x188] sm:$0xf]
    %v672 = vld [vmem:[#allocation2 + $0x18c] sm:$0xf]
    %v673 = vld [vmem:[#allocation2 + $0x190] sm:$0xf]
    %v674 = vld [vmem:[#allocation2 + $0x194] sm:$0xf]
    %v675 = vlaneseq
    %v676 = vshrl.u32 %v675, 7
    %v677 = vsub.s32 5, %v676
    %v678 = vrot.slane %v31, %v677
    %v695 = vunpack.c.l.b16 %v659
    %v696 = vunpack.c.l.b16 %v660
    %v697 = vunpack.c.l.b16 %v661
    %v698 = vunpack.c.l.b16 %v662
    %v699 = vunpack.c.l.b16 %v663
    %v700 = vunpack.c.l.b16 %v664
    %v701 = vunpack.c.l.b16 %v665
    %v702 = vunpack.c.l.b16 %v666
    %v703 = vunpack.c.l.b16 %v667
    %v704 = vunpack.c.l.b16 %v668
    %v705 = vunpack.c.l.b16 %v669
    %v706 = vunpack.c.l.b16 %v670
    %v707 = vunpack.c.l.b16 %v671
    %v708 = vunpack.c.l.b16 %v672
    %v709 = vunpack.c.l.b16 %v673
    %v710 = vunpack.c.l.b16 %v674
    %v711 = vpack.c.b16 %v696, %v695
    %v712 = vpack.c.b16 %v698, %v697
    %v713 = vpack.c.b16 %v700, %v699
    %v714 = vpack.c.b16 %v702, %v701
    %v715 = vpack.c.b16 %v704, %v703
    %v716 = vpack.c.b16 %v706, %v705
    %v717 = vpack.c.b16 %v708, %v707
    %v718 = vpack.c.b16 %v710, %v709
    %727 = vmatprep.subr.bf16.mxu0 0
    %728 = vmatpush1.bf16.msra.mxu0 %v718
    %729 = vmatprep.subr.bf16.mxu0 0
    %730 = vmatpush1.bf16.msra.mxu0 %v717
    %731 = vmatprep.subr.bf16.mxu0 0
    %732 = vmatpush1.bf16.msra.mxu0 %v716
    %733 = vmatprep.subr.bf16.mxu0 0
    %734 = vmatpush1.bf16.msra.mxu0 %v715
    %735 = vmatprep.subr.bf16.mxu0 0
    %736 = vmatpush1.bf16.msra.mxu0 %v714
    %737 = vmatprep.subr.bf16.mxu0 0
    %738 = vmatpush1.bf16.msra.mxu0 %v713
    %739 = vmatprep.subr.bf16.mxu0 0
    %740 = vmatpush1.bf16.msra.mxu0 %v712
    %741 = vmatprep.subr.bf16.mxu0 0
    %742 = vmatpush1.bf16.msra.mxu0 %v711
    %743 = vmatprep.subr.bf16.mxu0 0
    %744 = vmatpush2.bf16.msra.mxu0 0
    %745 = vmatprep.subr.bf16.mxu0 0
    %746 = vmatpush2.bf16.msra.mxu0 0
    %747 = vmatprep.subr.bf16.mxu0 0
    %748 = vmatpush2.bf16.msra.mxu0 0
    %749 = vmatprep.subr.bf16.mxu0 0
    %750 = vmatpush2.bf16.msra.mxu0 0
    %751 = vmatprep.subr.bf16.mxu0 0
    %752 = vmatpush2.bf16.msra.mxu0 0
    %753 = vmatprep.subr.bf16.mxu0 0
    %754 = vmatpush2.bf16.msra.mxu0 0
    %755 = vmatprep.subr.bf16.mxu0 0
    %756 = vmatpush2.bf16.msra.mxu0 0
    %757 = vmatprep.subr.bf16.mxu0 0
    %758 = vmatpush2.bf16.msra.mxu0 0
    %759 = vmatprep.mubr.bf16.mxu0 0
    %760 = vmatmul.mubr.bf16.gmra.mxu0 %v658
    %v761 = vpop.f32.mrf.mxu0
    %v762 = vadd.f32 %v678, %v761
    %v763 = vpop.f32.mrf.mxu0
    %v764 = vpop.f32.mrf.mxu0
    %v765 = vadd.f32 %v678, %v764
    %v766 = vpop.f32.mrf.mxu0
    %767 = vdwg.mxu0
    %v768 = vmul.f32 %v762, 0.5
    %v769 = vmul.f32 %v765, 0.5
    %v770 = vtanh.pop %v768
    %v771 = vtanh.pop %v769
    %v772 = vmul.f32 %v770, 0.5
    %v773 = vmul.f32 %v771, 0.5
    %v774 = vadd.f32 %v772, 0.5
    %v775 = vadd.f32 %v773, 0.5
    %v776 = vpack.c.bf16 %v775, %v774
    %v777 = vld [vmem:[#allocation2 + $0x198] sm:$0xf]
    %v778 = vld [vmem:[#allocation2 + $0x19c] sm:$0xf]
    %v779 = vld [vmem:[#allocation2 + $0x1a0] sm:$0xf]
    %v780 = vld [vmem:[#allocation2 + $0x1a4] sm:$0xf]
    %v781 = vld [vmem:[#allocation2 + $0x1a8] sm:$0xf]
    %v782 = vld [vmem:[#allocation2 + $0x1ac] sm:$0xf]
    %v783 = vld [vmem:[#allocation2 + $0x1b0] sm:$0xf]
    %v784 = vld [vmem:[#allocation2 + $0x1b4] sm:$0xf]
    %v785 = vld [vmem:[#allocation2 + $0x1b8] sm:$0xf]
    %v786 = vld [vmem:[#allocation2 + $0x1bc] sm:$0xf]
    %v787 = vld [vmem:[#allocation2 + $0x1c0] sm:$0xf]
    %v788 = vld [vmem:[#allocation2 + $0x1c4] sm:$0xf]
    %v789 = vld [vmem:[#allocation2 + $0x1c8] sm:$0xf]
    %v790 = vld [vmem:[#allocation2 + $0x1cc] sm:$0xf]
    %v791 = vld [vmem:[#allocation2 + $0x1d0] sm:$0xf]
    %v792 = vld [vmem:[#allocation2 + $0x1d4] sm:$0xf]
    %v793 = vlaneseq
    %v794 = vshrl.u32 %v793, 7
    %v795 = vsub.s32 6, %v794
    %v796 = vrot.slane %v31, %v795
    %v813 = vunpack.c.l.b16 %v777
    %v814 = vunpack.c.l.b16 %v778
    %v815 = vunpack.c.l.b16 %v779
    %v816 = vunpack.c.l.b16 %v780
    %v817 = vunpack.c.l.b16 %v781
    %v818 = vunpack.c.l.b16 %v782
    %v819 = vunpack.c.l.b16 %v783
    %v820 = vunpack.c.l.b16 %v784
    %v821 = vunpack.c.l.b16 %v785
    %v822 = vunpack.c.l.b16 %v786
    %v823 = vunpack.c.l.b16 %v787
    %v824 = vunpack.c.l.b16 %v788
    %v825 = vunpack.c.l.b16 %v789
    %v826 = vunpack.c.l.b16 %v790
    %v827 = vunpack.c.l.b16 %v791
    %v828 = vunpack.c.l.b16 %v792
    %v829 = vpack.c.b16 %v814, %v813
    %v830 = vpack.c.b16 %v816, %v815
    %v831 = vpack.c.b16 %v818, %v817
    %v832 = vpack.c.b16 %v820, %v819
    %v833 = vpack.c.b16 %v822, %v821
    %v834 = vpack.c.b16 %v824, %v823
    %v835 = vpack.c.b16 %v826, %v825
    %v836 = vpack.c.b16 %v828, %v827
    %845 = vmatprep.subr.bf16.mxu0 0
    %846 = vmatpush1.bf16.msra.mxu0 %v836
    %847 = vmatprep.subr.bf16.mxu0 0
    %848 = vmatpush1.bf16.msra.mxu0 %v835
    %849 = vmatprep.subr.bf16.mxu0 0
    %850 = vmatpush1.bf16.msra.mxu0 %v834
    %851 = vmatprep.subr.bf16.mxu0 0
    %852 = vmatpush1.bf16.msra.mxu0 %v833
    %853 = vmatprep.subr.bf16.mxu0 0
    %854 = vmatpush1.bf16.msra.mxu0 %v832
    %855 = vmatprep.subr.bf16.mxu0 0
    %856 = vmatpush1.bf16.msra.mxu0 %v831
    %857 = vmatprep.subr.bf16.mxu0 0
    %858 = vmatpush1.bf16.msra.mxu0 %v830
    %859 = vmatprep.subr.bf16.mxu0 0
    %860 = vmatpush1.bf16.msra.mxu0 %v829
    %861 = vmatprep.subr.bf16.mxu0 0
    %862 = vmatpush2.bf16.msra.mxu0 0
    %863 = vmatprep.subr.bf16.mxu0 0
    %864 = vmatpush2.bf16.msra.mxu0 0
    %865 = vmatprep.subr.bf16.mxu0 0
    %866 = vmatpush2.bf16.msra.mxu0 0
    %867 = vmatprep.subr.bf16.mxu0 0
    %868 = vmatpush2.bf16.msra.mxu0 0
    %869 = vmatprep.subr.bf16.mxu0 0
    %870 = vmatpush2.bf16.msra.mxu0 0
    %871 = vmatprep.subr.bf16.mxu0 0
    %872 = vmatpush2.bf16.msra.mxu0 0
    %873 = vmatprep.subr.bf16.mxu0 0
    %874 = vmatpush2.bf16.msra.mxu0 0
    %875 = vmatprep.subr.bf16.mxu0 0
    %876 = vmatpush2.bf16.msra.mxu0 0
    %877 = vmatprep.mubr.bf16.mxu0 0
    %878 = vmatmul.mubr.bf16.gmra.mxu0 %v776
    %v879 = vpop.f32.mrf.mxu0
    %v880 = vadd.f32 %v796, %v879
    %v881 = vpop.f32.mrf.mxu0
    %v882 = vpop.f32.mrf.mxu0
    %v883 = vadd.f32 %v796, %v882
    %v884 = vpop.f32.mrf.mxu0
    %885 = vdwg.mxu0
    %v886 = vmul.f32 %v880, 0.5
    %v887 = vmul.f32 %v883, 0.5
    %v888 = vtanh.pop %v886
    %v889 = vtanh.pop %v887
    %v890 = vmul.f32 %v888, 0.5
    %v891 = vmul.f32 %v889, 0.5
    %v892 = vadd.f32 %v890, 0.5
    %v893 = vadd.f32 %v891, 0.5
    %v894 = vpack.c.bf16 %v893, %v892
    %v895 = vld [vmem:[#allocation2 + $0x1d8] sm:$0xf]
    %v896 = vld [vmem:[#allocation2 + $0x1dc] sm:$0xf]
    %v897 = vld [vmem:[#allocation2 + $0x1e0] sm:$0xf]
    %v898 = vld [vmem:[#allocation2 + $0x1e4] sm:$0xf]
    %v899 = vld [vmem:[#allocation2 + $0x1e8] sm:$0xf]
    %v900 = vld [vmem:[#allocation2 + $0x1ec] sm:$0xf]
    %v901 = vld [vmem:[#allocation2 + $0x1f0] sm:$0xf]
    %v902 = vld [vmem:[#allocation2 + $0x1f4] sm:$0xf]
    %v903 = vld [vmem:[#allocation2 + $0x1f8] sm:$0xf]
    %v904 = vld [vmem:[#allocation2 + $0x1fc] sm:$0xf]
    %v905 = vld [vmem:[#allocation2 + $0x200] sm:$0xf]
    %v906 = vld [vmem:[#allocation2 + $0x204] sm:$0xf]
    %v907 = vld [vmem:[#allocation2 + $0x208] sm:$0xf]
    %v908 = vld [vmem:[#allocation2 + $0x20c] sm:$0xf]
    %v909 = vld [vmem:[#allocation2 + $0x210] sm:$0xf]
    %v910 = vld [vmem:[#allocation2 + $0x214] sm:$0xf]
    %v911 = vlaneseq
    %v912 = vshrl.u32 %v911, 7
    %v913 = vsub.s32 7, %v912
    %v914 = vrot.slane %v31, %v913
    %v931 = vunpack.c.l.b16 %v895
    %v932 = vunpack.c.l.b16 %v896
    %v933 = vunpack.c.l.b16 %v897
    %v934 = vunpack.c.l.b16 %v898
    %v935 = vunpack.c.l.b16 %v899
    %v936 = vunpack.c.l.b16 %v900
    %v937 = vunpack.c.l.b16 %v901
    %v938 = vunpack.c.l.b16 %v902
    %v939 = vunpack.c.l.b16 %v903
    %v940 = vunpack.c.l.b16 %v904
    %v941 = vunpack.c.l.b16 %v905
    %v942 = vunpack.c.l.b16 %v906
    %v943 = vunpack.c.l.b16 %v907
    %v944 = vunpack.c.l.b16 %v908
    %v945 = vunpack.c.l.b16 %v909
    %v946 = vunpack.c.l.b16 %v910
    %v947 = vpack.c.b16 %v932, %v931
    %v948 = vpack.c.b16 %v934, %v933
    %v949 = vpack.c.b16 %v936, %v935
    %v950 = vpack.c.b16 %v938, %v937
    %v951 = vpack.c.b16 %v940, %v939
    %v952 = vpack.c.b16 %v942, %v941
    %v953 = vpack.c.b16 %v944, %v943
    %v954 = vpack.c.b16 %v946, %v945
    %963 = vmatprep.subr.bf16.mxu0 0
    %964 = vmatpush1.bf16.msra.mxu0 %v954
    %965 = vmatprep.subr.bf16.mxu0 0
    %966 = vmatpush1.bf16.msra.mxu0 %v953
    %967 = vmatprep.subr.bf16.mxu0 0
    %968 = vmatpush1.bf16.msra.mxu0 %v952
    %969 = vmatprep.subr.bf16.mxu0 0
    %970 = vmatpush1.bf16.msra.mxu0 %v951
    %971 = vmatprep.subr.bf16.mxu0 0
    %972 = vmatpush1.bf16.msra.mxu0 %v950
    %973 = vmatprep.subr.bf16.mxu0 0
    %974 = vmatpush1.bf16.msra.mxu0 %v949
    %975 = vmatprep.subr.bf16.mxu0 0
    %976 = vmatpush1.bf16.msra.mxu0 %v948
    %977 = vmatprep.subr.bf16.mxu0 0
    %978 = vmatpush1.bf16.msra.mxu0 %v947
    %979 = vmatprep.subr.bf16.mxu0 0
    %980 = vmatpush2.bf16.msra.mxu0 0
    %981 = vmatprep.subr.bf16.mxu0 0
    %982 = vmatpush2.bf16.msra.mxu0 0
    %983 = vmatprep.subr.bf16.mxu0 0
    %984 = vmatpush2.bf16.msra.mxu0 0
    %985 = vmatprep.subr.bf16.mxu0 0
    %986 = vmatpush2.bf16.msra.mxu0 0
    %987 = vmatprep.subr.bf16.mxu0 0
    %988 = vmatpush2.bf16.msra.mxu0 0
    %989 = vmatprep.subr.bf16.mxu0 0
    %990 = vmatpush2.bf16.msra.mxu0 0
    %991 = vmatprep.subr.bf16.mxu0 0
    %992 = vmatpush2.bf16.msra.mxu0 0
    %993 = vmatprep.subr.bf16.mxu0 0
    %994 = vmatpush2.bf16.msra.mxu0 0
    %995 = vmatprep.mubr.bf16.mxu0 0
    %996 = vmatmul.mubr.bf16.gmra.mxu0 %v894
    %v997 = vpop.f32.mrf.mxu0
    %v998 = vadd.f32 %v914, %v997
    %v999 = vpop.f32.mrf.mxu0
    %v1000 = vpop.f32.mrf.mxu0
    %v1001 = vadd.f32 %v914, %v1000
    %v1002 = vpop.f32.mrf.mxu0
    %1003 = vdwg.mxu0
    %v1004 = vmul.f32 %v998, 0.5
    %v1005 = vmul.f32 %v1001, 0.5
    %v1006 = vtanh.pop %v1004
    %v1007 = vtanh.pop %v1005
    %v1008 = vmul.f32 %v1006, 0.5
    %v1009 = vmul.f32 %v1007, 0.5
    %v1010 = vadd.f32 %v1008, 0.5
    %v1011 = vadd.f32 %v1009, 0.5
    %v1012 = vpack.c.bf16 %v1011, %v1010
    %v1014 = vunpack.c.l.b16 %v1012
    %v1015 = vunpack.c.h.b16 %v1012
    %v1016 = vpack.c.b16 %v1014, %v1014
    %v1017 = vpack.c.b16 %v1015, %v1015
    %1020 = vst [vmem:[%s3] sm:$0xf] %v1016
    %1021 = vst [vmem:[%s3 + $0x4] sm:$0xf] %v1017
    // Predicated region
    $region18: #{neural_net_forward.1} parent=1 // pred_check
      _
    $region19: #{neural_net_forward.1} parent=1 // pred_check_branch
      %1023 = sbr.rel (0) target = $region21
    $region20: #{neural_net_forward.1} parent=1 // pred_region
      _
    $region21: #{neural_net_forward.1} parent=1 // pred_fallthru
      _
    // Predicated region
    $region22: #{neural_net_forward.1} parent=1 // pred_check
      _
    $region23: #{neural_net_forward.1} parent=1 // pred_check_branch
      %1025 = sbr.rel (0) target = $region25
    $region24: #{neural_net_forward.1} parent=1 // pred_region
      _
    $region25: #{neural_net_forward.1} parent=1 // pred_fallthru
      _
    %1026 = vsyncpa [#allocation3], 1

</llo_original>
